<compile_context>
chip_gen: v5e
topology: v5e:2x2
jax: 0.10.0
libtpu: 0.0.40
codegen_flags: <defaults>
</compile_context>

<pallas_src>
import jax
import jax.numpy as jnp
from jax.experimental import pallas as pl
from jax.experimental.pallas import tpu as pltpu


def _round_up(n, m):
    return ((n + m - 1) // m) * m


def _cdiv(a, b):
    return (a + b - 1) // b


def _vmem_capacity_bytes():
    """Per-generation VMEM capacity; conservative fallback if query fails."""
    try:
        info = pltpu.get_tpu_info()
        for attr in ("vmem_capacity_bytes", "vmem_bytes", "vmem_size_bytes"):
            v = getattr(info, attr, None)
            if v:
                return int(v)
    except Exception:
        pass
    return 64 * 1024 * 1024  # v7x per-TensorCore VMEM (smallest of the fleet)


def ffn_kernel(x_ref, w1_ref, b1_ref, w2_ref, b2_ref, o_ref, acc_ref):
    # x_ref:  (tm, D)          w1_ref: (D, tf)   b1_ref: (1, tf)
    # w2_ref: (tf, Dp)         b2_ref: (1, Dp)
    # o_ref:  (tm, Dp)         acc_ref: (tm, Dp) f32 scratch
    k = pl.program_id(1)

    @pl.when(k == 0)
    def _init():
        acc_ref[...] = jnp.zeros_like(acc_ref)

    x = x_ref[...]
    h = jnp.dot(x, w1_ref[...], preferred_element_type=jnp.float32)
    h = jnp.maximum(h + b1_ref[...], 0.0)          # bias + ReLU on this d_ff slice
    # dropout: identity (inference / eval() semantics)
    acc_ref[...] += jnp.dot(h.astype(x.dtype), w2_ref[...],
                            preferred_element_type=jnp.float32)

    @pl.when(k == pl.num_programs(1) - 1)
    def _finalize():
        o_ref[...] = (acc_ref[...] + b2_ref[...]).astype(o_ref.dtype)


def positionwise_feed_forward(x, w1, b1, w2, b2, *, max_tm=2048, max_tf=512):
    """x: (batch, seq, d_model) -> (batch, seq, d_model)."""
    B, S, D = x.shape
    d_ff = w1.shape[1]
    M = B * S
    dtype = x.dtype
    itemsize = jnp.dtype(dtype).itemsize
    sub = max(8, 32 // itemsize)              # sublane packing for this dtype

    # ---- d_ff (reduction) tile --------------------------------------------
    if d_ff <= max_tf:
        tf, Fp = d_ff, d_ff                   # single reduction step, no pad
    elif d_ff % max_tf == 0:
        tf, Fp = max_tf, d_ff
    elif d_ff % 256 == 0:
        tf, Fp = 256, d_ff
    elif d_ff % 128 == 0:
        tf, Fp = 128, d_ff
    else:
        tf = max_tf
        Fp = _round_up(d_ff, tf)              # zero-pad weights (result exact)

    # ---- d_model lane padding (weights/bias/output only, never x) ----------
    Dp = D if D % 128 == 0 else _round_up(D, 128)

    # ---- token tile: largest tile fitting the per-generation VMEM budget ---
    vmem_cap = _vmem_capacity_bytes()
    budget = int(0.70 * vmem_cap)

    def usage(tm):
        return (2 * tm * D * itemsize            # x tiles (double-buffered)
                + 2 * D * tf * itemsize          # W1 tiles
                + 2 * tf * Dp * itemsize         # W2 tiles
                + 2 * tm * Dp * itemsize         # output tiles
                + 2 * 8 * (tf + Dp) * itemsize   # b1 / b2 (sublane-padded)
                + tm * Dp * 4                    # f32 accumulator scratch
                + tm * tf * 4                    # h (f32 MXU result)
                + tm * tf * itemsize)            # h cast fed to 2nd matmul

    tm = max_tm
    while tm > 256 and usage(tm) > budget:
        tm -= 256                                # keep a multiple of 256 (MXU fill)
    while tm > sub and usage(tm) > budget:
        tm -= sub                                # last resort for huge features
    tm = max(tm, sub)

    tm = min(tm, _round_up(M, sub))              # don't exceed the token count
    # Expose >=2 steps on the "parallel" M axis when possible (v7x megacore).
    while _cdiv(M, tm) < 2 and tm >= 512:
        tm //= 2

    grid = (_cdiv(M, tm), Fp // tf)

    # ---- zero-pad weights / biases only when needed (exact result) ---------
    w1p = w1 if Fp == d_ff else jnp.pad(w1, ((0, 0), (0, Fp - d_ff)))
    b1p = (b1 if Fp == d_ff else jnp.pad(b1, (0, Fp - d_ff))).reshape(1, Fp)
    w2p = w2 if (Fp, Dp) == (d_ff, D) else jnp.pad(
        w2, ((0, Fp - d_ff), (0, Dp - D)))
    b2p = (b2 if Dp == D else jnp.pad(b2, (0, Dp - D))).reshape(1, Dp)

    x2d = x.reshape(M, D)                        # free reshape; x is NOT padded

    used = usage(tm)
    vmem_limit = max(used + (8 << 20), 32 << 20)
    vmem_limit = min(vmem_limit, int(0.85 * vmem_cap))
    vmem_limit = max(vmem_limit, used + (2 << 20))

    out2d = pl.pallas_call(
        ffn_kernel,
        out_shape=jax.ShapeDtypeStruct((M, Dp), dtype),
        grid_spec=pltpu.PrefetchScalarGridSpec(
            num_scalar_prefetch=0,
            grid=grid,
            in_specs=[
                pl.BlockSpec((tm, D), lambda i, k: (i, 0)),    # x tile
                pl.BlockSpec((D, tf), lambda i, k: (0, k)),    # W1 slice
                pl.BlockSpec((1, tf), lambda i, k: (0, k)),    # b1 slice
                pl.BlockSpec((tf, Dp), lambda i, k: (k, 0)),   # W2 slice
                pl.BlockSpec((1, Dp), lambda i, k: (0, 0)),    # b2
            ],
            out_specs=pl.BlockSpec((tm, Dp), lambda i, k: (i, 0)),
            scratch_shapes=[pltpu.VMEM((tm, Dp), jnp.float32)],
        ),
        compiler_params=pltpu.CompilerParams(
            dimension_semantics=("parallel", "arbitrary"),
            vmem_limit_bytes=int(vmem_limit)),
    )(x2d, w1p, b1p, w2p, b2p)

    out2d = out2d if Dp == D else out2d[:, :D]
    return out2d.reshape(B, S, D)


def reference_ffn(x, w1, b1, w2, b2):
    h = jnp.maximum(jnp.dot(x, w1) + b1, 0.0)
    return jnp.dot(h, w2) + b2


if __name__ == "__main__":
    key = jax.random.PRNGKey(0)

    # --- Test 1: small shapes implied by the module (unaligned feature dims;
    #             only weights get lane-padded internally; result exact). ----
    batch, seq, d_model, d_ff = 2, 8, 32, 64
    kx, k1, k2, k3, k4, key = jax.random.split(key, 6)
    bound1 = 1.0 / (d_model ** 0.5)
    bound2 = 1.0 / (d_ff ** 0.5)
    w1 = jax.random.uniform(k1, (d_model, d_ff), jnp.float32, -bound1, bound1)
    b1 = jax.random.uniform(k2, (d_ff,), jnp.float32, -bound1, bound1)
    w2 = jax.random.uniform(k3, (d_ff, d_model), jnp.float32, -bound2, bound2)
    b2 = jax.random.uniform(k4, (d_model,), jnp.float32, -bound2, bound2)
    x = jax.random.normal(kx, (batch, seq, d_model), jnp.float32)

    out = jax.block_until_ready(positionwise_feed_forward(x, w1, b1, w2, b2))
    ref = reference_ffn(x, w1, b1, w2, b2)
    assert out.shape == (batch, seq, d_model)
    assert jnp.allclose(out, ref, atol=1e-5, rtol=1e-5), float(
        jnp.max(jnp.abs(out - ref)))

    # --- Test 2: exercises multi-step grid on BOTH axes (M tiles + d_ff
    #             reduction with the f32 accumulator). ----------------------
    batch2, seq2, d_model2, d_ff2 = 2, 256, 128, 1024
    kx, k1, k2, k3, k4, key = jax.random.split(key, 6)
    bound1 = 1.0 / (d_model2 ** 0.5)
    bound2 = 1.0 / (d_ff2 ** 0.5)
    w1b = jax.random.uniform(k1, (d_model2, d_ff2), jnp.float32, -bound1, bound1)
    b1b = jax.random.uniform(k2, (d_ff2,), jnp.float32, -bound1, bound1)
    w2b = jax.random.uniform(k3, (d_ff2, d_model2), jnp.float32, -bound2, bound2)
    b2b = jax.random.uniform(k4, (d_model2,), jnp.float32, -bound2, bound2)
    xb = jax.random.normal(kx, (batch2, seq2, d_model2), jnp.float32)

    outb = jax.block_until_ready(
        positionwise_feed_forward(xb, w1b, b1b, w2b, b2b))
    refb = reference_ffn(xb, w1b, b1b, w2b, b2b)
    assert outb.shape == (batch2, seq2, d_model2)
    assert jnp.allclose(outb, refb, atol=1e-3, rtol=1e-3), float(
        jnp.max(jnp.abs(outb - refb)))

    print("KERNEL_OK")
</pallas_src>

<mosaic_0001>
module attributes {stable_mosaic.version = 11 : i64} {
  func.func @ffn_kernel(%arg0: i32, %arg1: i32, %arg2: memref<16x32xf32, #tpu.memory_space<vmem>>, %arg3: memref<32x64xf32, #tpu.memory_space<vmem>>, %arg4: memref<1x64xf32, #tpu.memory_space<vmem>>, %arg5: memref<64x128xf32, #tpu.memory_space<vmem>>, %arg6: memref<1x128xf32, #tpu.memory_space<vmem>>, %arg7: memref<16x128xf32, #tpu.memory_space<vmem>>, %arg8: memref<16x128xf32, #tpu.memory_space<vmem>>) attributes {dimension_semantics = [#tpu.dimension_semantics<parallel>, #tpu.dimension_semantics<arbitrary>], iteration_bounds = array<i64: 1, 1>, scalar_prefetch = 0 : i64, scratch_operands = 1 : i64, tpu.core_type = #tpu.core_type<tc>, window_params = [{transform_indices = @transform_0, window_bounds = array<i64: 16, 32>}, {transform_indices = @transform_1, window_bounds = array<i64: 32, 64>}, {transform_indices = @transform_2, window_bounds = array<i64: 1, 64>}, {transform_indices = @transform_3, window_bounds = array<i64: 64, 128>}, {pipeline_mode = #tpu.pipeline_mode<synchronous>, transform_indices = @transform_4, window_bounds = array<i64: 1, 128>}, {transform_indices = @transform_5, window_bounds = array<i64: 16, 128>}]} {
    %c0_i32 = arith.constant 0 : i32
    %0 = arith.cmpi eq, %arg1, %c0_i32 : i32
    %1 = arith.extui %0 : i1 to i32
    %c0_i32_0 = arith.constant 0 : i32
    %2 = arith.cmpi ne, %1, %c0_i32_0 : i32
    scf.if %2 {
      %cst_16 = arith.constant 0.000000e+00 : f32
      %19 = vector.broadcast %cst_16 : f32 to vector<16x128xf32>
      %c0_17 = arith.constant 0 : index
      %c0_18 = arith.constant 0 : index
      %20 = vector.load %arg8[%c0_17, %c0_18] : memref<16x128xf32, #tpu.memory_space<vmem>>, vector<16x128xf32>
      tpu.vector_store %arg8[%c0_17, %c0_18], %19 {strides = array<i32>} : memref<16x128xf32, #tpu.memory_space<vmem>>, vector<16x128xf32>,
    } else {
    }
    %c0 = arith.constant 0 : index
    %c0_1 = arith.constant 0 : index
    %3 = vector.load %arg2[%c0, %c0_1] : memref<16x32xf32, #tpu.memory_space<vmem>>, vector<16x32xf32>
    %c0_2 = arith.constant 0 : index
    %c0_3 = arith.constant 0 : index
    %4 = vector.load %arg3[%c0_2, %c0_3] : memref<32x64xf32, #tpu.memory_space<vmem>>, vector<32x64xf32>
    %cst = arith.constant dense<0.000000e+00> : vector<16x64xf32>
    %5 = tpu.matmul %3, %4, %cst {dimension_numbers = #tpu.dot_dimension_numbers<[1], [0], [0], [1], [0, 0, 1, 1], [], []>} : vector<16x32xf32>, vector<32x64xf32>, vector<16x64xf32> -> vector<16x64xf32>
    %c0_4 = arith.constant 0 : index
    %c0_5 = arith.constant 0 : index
    %6 = vector.load %arg4[%c0_4, %c0_5] : memref<1x64xf32, #tpu.memory_space<vmem>>, vector<1x64xf32>
    %7 = vector.broadcast %6 : vector<1x64xf32> to vector<16x64xf32>
    %8 = arith.addf %5, %7 : vector<16x64xf32>
    %cst_6 = arith.constant 0.000000e+00 : f32
    %9 = vector.broadcast %cst_6 : f32 to vector<16x64xf32>
    %10 = arith.maximumf %8, %9 : vector<16x64xf32>
    %c0_7 = arith.constant 0 : index
    %c0_8 = arith.constant 0 : index
    %11 = vector.load %arg8[%c0_7, %c0_8] : memref<16x128xf32, #tpu.memory_space<vmem>>, vector<16x128xf32>
    %c0_9 = arith.constant 0 : index
    %c0_10 = arith.constant 0 : index
    %12 = vector.load %arg5[%c0_9, %c0_10] : memref<64x128xf32, #tpu.memory_space<vmem>>, vector<64x128xf32>
    %cst_11 = arith.constant dense<0.000000e+00> : vector<16x128xf32>
    %13 = tpu.matmul %10, %12, %cst_11 {dimension_numbers = #tpu.dot_dimension_numbers<[1], [0], [0], [1], [0, 0, 1, 1], [], []>} : vector<16x64xf32>, vector<64x128xf32>, vector<16x128xf32> -> vector<16x128xf32>
    %14 = arith.addf %11, %13 : vector<16x128xf32>
    %c0_12 = arith.constant 0 : index
    %c0_13 = arith.constant 0 : index
    %15 = vector.load %arg8[%c0_12, %c0_13] : memref<16x128xf32, #tpu.memory_space<vmem>>, vector<16x128xf32>
    tpu.vector_store %arg8[%c0_12, %c0_13], %14 {strides = array<i32>} : memref<16x128xf32, #tpu.memory_space<vmem>>, vector<16x128xf32>,
    %c0_i32_14 = arith.constant 0 : i32
    %16 = arith.cmpi eq, %arg1, %c0_i32_14 : i32
    %17 = arith.extui %16 : i1 to i32
    %c0_i32_15 = arith.constant 0 : i32
    %18 = arith.cmpi ne, %17, %c0_i32_15 : i32
    scf.if %18 {
      %c0_16 = arith.constant 0 : index
      %c0_17 = arith.constant 0 : index
      %19 = vector.load %arg8[%c0_16, %c0_17] : memref<16x128xf32, #tpu.memory_space<vmem>>, vector<16x128xf32>
      %c0_18 = arith.constant 0 : index
      %c0_19 = arith.constant 0 : index
      %20 = vector.load %arg6[%c0_18, %c0_19] : memref<1x128xf32, #tpu.memory_space<vmem>>, vector<1x128xf32>
      %21 = vector.broadcast %20 : vector<1x128xf32> to vector<16x128xf32>
      %22 = arith.addf %19, %21 : vector<16x128xf32>
      %c0_20 = arith.constant 0 : index
      %c0_21 = arith.constant 0 : index
      %23 = vector.load %arg7[%c0_20, %c0_21] : memref<16x128xf32, #tpu.memory_space<vmem>>, vector<16x128xf32>
      tpu.vector_store %arg7[%c0_20, %c0_21], %22 {strides = array<i32>} : memref<16x128xf32, #tpu.memory_space<vmem>>, vector<16x128xf32>,
    } else {
    }
    return
  }
  func.func @transform_0(%arg0: i32, %arg1: i32) -> (i32, i32) {
    %c0_i32 = arith.constant 0 : i32
    %c0_i32_0 = arith.constant 0 : i32
    return %arg0, %c0_i32 : i32, i32
  }
  func.func @transform_1(%arg0: i32, %arg1: i32) -> (i32, i32) {
    %c0_i32 = arith.constant 0 : i32
    %c0_i32_0 = arith.constant 0 : i32
    return %c0_i32, %arg1 : i32, i32
  }
  func.func @transform_2(%arg0: i32, %arg1: i32) -> (i32, i32) {
    %c0_i32 = arith.constant 0 : i32
    %c0_i32_0 = arith.constant 0 : i32
    return %c0_i32, %arg1 : i32, i32
  }
  func.func @transform_3(%arg0: i32, %arg1: i32) -> (i32, i32) {
    %c0_i32 = arith.constant 0 : i32
    %c0_i32_0 = arith.constant 0 : i32
    return %arg1, %c0_i32 : i32, i32
  }
  func.func @transform_4(%arg0: i32, %arg1: i32) -> (i32, i32) {
    %c0_i32 = arith.constant 0 : i32
    %c0_i32_0 = arith.constant 0 : i32
    %c0_i32_1 = arith.constant 0 : i32
    return %c0_i32, %c0_i32_0 : i32, i32
  }
  func.func @transform_5(%arg0: i32, %arg1: i32) -> (i32, i32) {
    %c0_i32 = arith.constant 0 : i32
    %c0_i32_0 = arith.constant 0 : i32
    return %arg0, %c0_i32 : i32, i32
  }
}

</mosaic_0001>

<llo_original>
// kernel: tpu_custom_call.1
$region0: #{tpu_custom_call.1}
  #allocation0 [shape = 'u32[]', space=smem, size = 0x4, offset = 0x4, fixed_abs, tag = 'smem constant byte address 0x4 - core index']
  #allocation1 [shape = 'u32[72,128]{1,0:T(1,128)}', space=vmem, size = 0x9000, scoped, tag = 'internal scratch']
  #allocation2 [shape = 'f32[16,128]{1,0:T(8,128)}', space=vmem, size = 0x2000, scoped, tag = 'scratch operand']
  %s0 = inlined_call_operand.hbm [shape: f32[16,32], index: 0, kind: input, shape index: {}]
  %s1 = inlined_call_operand.hbm [shape: f32[32,64], index: 1, kind: input, shape index: {}]
  %s2 = inlined_call_operand.vmem [shape: f32[1,64], index: 2, kind: input, shape index: {}]
  %s3 = inlined_call_operand.hbm [shape: f32[64,128], index: 3, kind: input, shape index: {}]
  %s4 = inlined_call_operand.vmem [shape: f32[1,128], index: 4, kind: input, shape index: {}]
  %s5 = inlined_call_operand.hbm [shape: f32[16,128], index: 5, kind: output, shape index: {}]
  %s6 = sld [smem:[#allocation0]]
  $region50: #{tpu_custom_call.1} parent=0
    _
  %s8 = ssub.s32 1, %s6
  %s9 = scalar_select 0, %s8, %s6
  $region1: #{tpu_custom_call.1} parent=0
    #allocation3 [shape = 'u8[8192]{0}', space=vmem, size = 0x2000, scoped, tag = 'input window, operand 0, single buffered']
    #allocation4 [shape = 's32[1]{0}', space=sflag, size = 0x4, scoped, tag = 'scoped memory for tpu_custom_call.1']
    #allocation5 [shape = 's32[1]{0}', space=sflag, size = 0x4, scoped, tag = 'scoped memory for tpu_custom_call.1']
    #allocation6 [shape = 'u8[16384]{0}', space=vmem, size = 0x4000, scoped, tag = 'input window, operand 1, single buffered']
    #allocation7 [shape = 's32[1]{0}', space=sflag, size = 0x4, scoped, tag = 'scoped memory for tpu_custom_call.1']
    #allocation8 [shape = 'u8[32768]{0}', space=vmem, size = 0x8000, scoped, tag = 'input window, operand 3, single buffered']
    #allocation9 [shape = 'u8[8192]{0}', space=vmem, size = 0x2000, scoped, tag = 'output window, operand 0, single buffered']
    %10 = vsyncpa [#allocation4], 0
    %11 = vsyncpa [#allocation7], 0
    %12 = vsyncpa [#allocation5], 0
    // Predicated region
    $region2: #{tpu_custom_call.1} parent=1 // pred_check
      _
    $region3: #{tpu_custom_call.1} parent=1 // pred_check_branch
      %14 = sbr.rel (0) target = $region5
    $region4: #{tpu_custom_call.1} parent=1 // pred_region
      %16 = vsyncadd [#allocation4], 0
      %s17 = sshll.u32 %s0, 4
      %s18 = int_to_ptr.hbm [resolvable:$true] %s17
      %s19 = sshll.u32 [#allocation3], 4
      %s20 = int_to_ptr.vmem [resolvable:$true] %s19
      %25 = dma.hbm_to_vmem [thread:$0]  %s18, 256, %s20, [#allocation4], 128, 128, 8
    $region5: #{tpu_custom_call.1} parent=1 // pred_fallthru
      _
    // Predicated region
    $region6: #{tpu_custom_call.1} parent=1 // pred_check
      _
    $region7: #{tpu_custom_call.1} parent=1 // pred_check_branch
      %27 = sbr.rel (0) target = $region9
    $region8: #{tpu_custom_call.1} parent=1 // pred_region
      %29 = vsyncadd [#allocation7], 0
      %s30 = sshll.u32 %s1, 4
      %s31 = int_to_ptr.hbm [resolvable:$true] %s30
      %s32 = sshll.u32 [#allocation6], 4
      %s33 = int_to_ptr.vmem [resolvable:$true] %s32
      %38 = dma.hbm_to_vmem [thread:$0]  %s31, 512, %s33, [#allocation7], 128, 128, 8
    $region9: #{tpu_custom_call.1} parent=1 // pred_fallthru
      _
    // Predicated region
    $region10: #{tpu_custom_call.1} parent=1 // pred_check
      _
    $region11: #{tpu_custom_call.1} parent=1 // pred_check_branch
      %40 = sbr.rel (0) target = $region13
    $region12: #{tpu_custom_call.1} parent=1 // pred_region
      _
    $region13: #{tpu_custom_call.1} parent=1 // pred_fallthru
      _
    // Predicated region
    $region14: #{tpu_custom_call.1} parent=1 // pred_check
      _
    $region15: #{tpu_custom_call.1} parent=1 // pred_check_branch
      %42 = sbr.rel (0) target = $region17
    $region16: #{tpu_custom_call.1} parent=1 // pred_region
      %44 = vsyncadd [#allocation7], 0
      %s45 = sshll.u32 %s3, 4
      %s46 = int_to_ptr.hbm [resolvable:$true] %s45
      %s47 = sshll.u32 [#allocation8], 4
      %s48 = int_to_ptr.vmem [resolvable:$true] %s47
      %53 = dma.hbm_to_vmem [thread:$0]  %s46, 1024, %s48, [#allocation7], 128, 128, 8
    $region17: #{tpu_custom_call.1} parent=1 // pred_fallthru
      _
    // Predicated region
    $region18: #{tpu_custom_call.1} parent=1 // pred_check
      _
    $region19: #{tpu_custom_call.1} parent=1 // pred_check_branch
      %55 = sbr.rel (0) target = $region21
    $region20: #{tpu_custom_call.1} parent=1 // pred_region
      _
    $region21: #{tpu_custom_call.1} parent=1 // pred_fallthru
      _
    // Predicated region
    $region22: #{tpu_custom_call.1} parent=1 // pred_check
      _
    $region23: #{tpu_custom_call.1} parent=1 // pred_check_branch
      %57 = sbr.rel (0) target = $region25
    $region24: #{tpu_custom_call.1} parent=1 // pred_region
      %59 = dma.done [#allocation4], 256
    $region25: #{tpu_custom_call.1} parent=1 // pred_fallthru
      _
    // Predicated region
    $region26: #{tpu_custom_call.1} parent=1 // pred_check
      _
    $region27: #{tpu_custom_call.1} parent=1 // pred_check_branch
      %61 = sbr.rel (0) target = $region29
    $region28: #{tpu_custom_call.1} parent=1 // pred_region
      %63 = dma.done [#allocation7], 512
    $region29: #{tpu_custom_call.1} parent=1 // pred_fallthru
      _
    // Predicated region
    $region30: #{tpu_custom_call.1} parent=1 // pred_check
      _
    $region31: #{tpu_custom_call.1} parent=1 // pred_check_branch
      %65 = sbr.rel (0) target = $region33
    $region32: #{tpu_custom_call.1} parent=1 // pred_region
      %67 = dma.done [#allocation7], 1024
    $region33: #{tpu_custom_call.1} parent=1 // pred_fallthru
      _
    %p68 = scmp.eq.s32.totalorder 0, 0
    // Predicated region
    $region34: #{tpu_custom_call.1} parent=1 // pred_check
      %p69 = pneg %p68
    $region35: #{tpu_custom_call.1} parent=1 // pred_check_branch
      %71 = sbr.rel (%p69) target = $region37
    $region36: #{tpu_custom_call.1} parent=1 // pred_region
      %72 = vst [vmem:[#allocation2] sm:$0xff] 0.0
      %73 = vst [vmem:[#allocation2 + $0x8] sm:$0xff] 0.0
    $region37: #{tpu_custom_call.1} parent=1 // pred_fallthru
      _
    %v74 = vld [vmem:[#allocation3] sm:$0xff]
    %v75 = vld [vmem:[#allocation3 + $0x8] sm:$0xff]
    %v76 = vld [vmem:[#allocation6] sm:$0xff]
    %v77 = vld [vmem:[#allocation6 + $0x8] sm:$0xff]
    %v78 = vld [vmem:[#allocation6 + $0x10] sm:$0xff]
    %v79 = vld [vmem:[#allocation6 + $0x18] sm:$0xff]
    %v80 = vld [vmem:[%s2] sm:$0x1]
    %v82 = vperm.slane %v80, 0
    %vm84 = vcmask 261120
    %v86 = vsel %vm84, %v74, 0
    %v89 = vsel %vm84, %v75, 0
    %91 = vmatpush.msra.mxu0 0.0
    %92 = vmatpush.msra.mxu0 0.0
    %93 = vmatpush.msra.mxu0 0.0
    %94 = vmatpush.msra.mxu0 0.0
    %95 = vmatpush.msra.mxu0 0.0
    %96 = vmatpush.msra.mxu0 0.0
    %97 = vmatpush.msra.mxu0 0.0
    %98 = vmatpush.msra.mxu0 0.0
    %99 = vmatpush.msra.mxu0 0.0
    %100 = vmatpush.msra.mxu0 0.0
    %101 = vmatpush.msra.mxu0 0.0
    %102 = vmatpush.msra.mxu0 0.0
    %103 = vmatpush.msra.mxu0 %v79
    %104 = vmatpush.msra.mxu0 %v78
    %105 = vmatpush.msra.mxu0 %v77
    %106 = vmatpush.msra.mxu0 %v76
    %107 = vmatmul.f32.gmra.mxu0 %v86
    %v108 = vpop.f32.mrf.mxu0
    %v109 = vadd.f32 %v82, %v108
    %110 = vmatmul.f32.gmra.mxu0 %v89
    %v111 = vpop.f32.mrf.mxu0
    %v112 = vadd.f32 %v82, %v111
    %113 = vdwg.mxu0
    %v114 = vmax.f32 %v109, 0.0
    %v115 = vmax.f32 %v112, 0.0
    %v116 = vld [vmem:[#allocation2] sm:$0xff]
    %v117 = vld [vmem:[#allocation2 + $0x8] sm:$0xff]
    %v118 = vld [vmem:[#allocation8] sm:$0xff]
    %v119 = vld [vmem:[#allocation8 + $0x8] sm:$0xff]
    %v120 = vld [vmem:[#allocation8 + $0x10] sm:$0xff]
    %v121 = vld [vmem:[#allocation8 + $0x18] sm:$0xff]
    %v122 = vld [vmem:[#allocation8 + $0x20] sm:$0xff]
    %v123 = vld [vmem:[#allocation8 + $0x28] sm:$0xff]
    %v124 = vld [vmem:[#allocation8 + $0x30] sm:$0xff]
    %v125 = vld [vmem:[#allocation8 + $0x38] sm:$0xff]
    %vm126 = vcmask 523264
    %v128 = vsel %vm126, %v114, 0
    %v131 = vsel %vm126, %v115, 0
    %133 = vmatpush.msra.mxu0 0.0
    %134 = vmatpush.msra.mxu0 0.0
    %135 = vmatpush.msra.mxu0 0.0
    %136 = vmatpush.msra.mxu0 0.0
    %137 = vmatpush.msra.mxu0 0.0
    %138 = vmatpush.msra.mxu0 0.0
    %139 = vmatpush.msra.mxu0 0.0
    %140 = vmatpush.msra.mxu0 0.0
    %141 = vmatpush.msra.mxu0 %v125
    %142 = vmatpush.msra.mxu0 %v124
    %143 = vmatpush.msra.mxu0 %v123
    %144 = vmatpush.msra.mxu0 %v122
    %145 = vmatpush.msra.mxu0 %v121
    %146 = vmatpush.msra.mxu0 %v120
    %147 = vmatpush.msra.mxu0 %v119
    %148 = vmatpush.msra.mxu0 %v118
    %149 = vmatmul.f32.gmra.mxu0 %v128
    %v150 = vpop.f32.mrf.mxu0
    %v151 = vadd.f32 0.0, %v150
    %152 = vmatmul.f32.gmra.mxu0 %v131
    %v153 = vpop.f32.mrf.mxu0
    %v154 = vadd.f32 0.0, %v153
    %155 = vdwg.mxu0
    %v156 = vadd.f32 %v116, %v151
    %v157 = vadd.f32 %v117, %v154
    %158 = vst [vmem:[#allocation2] sm:$0xff] %v156
    %159 = vst [vmem:[#allocation2 + $0x8] sm:$0xff] %v157
    // Predicated region
    $region38: #{tpu_custom_call.1} parent=1 // pred_check
      %p160 = pneg %p68
    $region39: #{tpu_custom_call.1} parent=1 // pred_check_branch
      %162 = sbr.rel (%p160) target = $region41
    $region40: #{tpu_custom_call.1} parent=1 // pred_region
      %v163 = vld [vmem:[#allocation2] sm:$0xff]
      %v164 = vld [vmem:[#allocation2 + $0x8] sm:$0xff]
      %v165 = vld [vmem:[%s4] sm:$0x1]
      %v167 = vperm.slane %v165, 0
      %v169 = vadd.f32 %v163, %v167
      %v170 = vadd.f32 %v164, %v167
      %171 = vst [vmem:[#allocation9] sm:$0xff] %v169
      %172 = vst [vmem:[#allocation9 + $0x8] sm:$0xff] %v170
    $region41: #{tpu_custom_call.1} parent=1 // pred_fallthru
      _
    // Predicated region
    $region42: #{tpu_custom_call.1} parent=1 // pred_check
      _
    $region43: #{tpu_custom_call.1} parent=1 // pred_check_branch
      %174 = sbr.rel (0) target = $region45
    $region44: #{tpu_custom_call.1} parent=1 // pred_region
      %176 = vsyncadd [#allocation5], 0
      %s177 = sshll.u32 [#allocation9], 4
      %s178 = int_to_ptr.vmem [resolvable:$true] %s177
      %s179 = sshll.u32 %s5, 4
      %s180 = int_to_ptr.hbm [resolvable:$true] %s179
      %185 = dma.vmem_to_hbm [thread:$0]  %s178, 256, %s180, [#allocation5], 128, 128, 8
    $region45: #{tpu_custom_call.1} parent=1 // pred_fallthru
      _
    // Predicated region
    $region46: #{tpu_custom_call.1} parent=1 // pred_check
      _
    $region47: #{tpu_custom_call.1} parent=1 // pred_check_branch
      %187 = sbr.rel (0) target = $region49
    $region48: #{tpu_custom_call.1} parent=1 // pred_region
      %189 = dma.done [#allocation5], 256
    $region49: #{tpu_custom_call.1} parent=1 // pred_fallthru
      _
    %190 = vsyncpa [#allocation4], 1
    %191 = vsyncpa [#allocation7], 1
    %192 = vsyncpa [#allocation5], 1

</llo_original>
